<compile_context>
chip_gen: v7x
topology: tpu7x:2x2x1
jax: 0.10.0
libtpu: 0.0.40
codegen_flags: <defaults>
</compile_context>

<pallas_src>
import jax
import jax.numpy as jnp
from jax.experimental import pallas as pl
from jax.experimental.pallas import tpu as pltpu


def _round_up(n, m):
    return ((n + m - 1) // m) * m


def _peptide_clf_kernel(x_ref, w1_ref, b1_ref, w2_ref, b2_ref, o_ref):
    # x_ref:  [TB, IN]   natural-layout batch tile (contiguous DMA)
    # w1_ref: [IN, H]    b1_ref: [1, H]
    # w2_ref: [1, H]     b2_ref: [1, 1]
    # o_ref:  [TB, 1]
    # Layer 1 (Linear 76->32 + ReLU) on the MXU with f32 accumulation.
    h = jnp.dot(x_ref[...], w1_ref[...], preferred_element_type=jnp.float32)  # [TB, H]
    h = jnp.maximum(h + b1_ref[...], 0.0)

    # n_layers=0 -> hidden_layers is Identity; dropout=0 -> identity; batchnorm=False.

    # Layer 2 (Linear 32->1) on VPU/XLU: broadcast multiply + lane reduce over H.
    out = jnp.sum(h * w2_ref[...], axis=1, keepdims=True) + b2_ref[...]        # [TB, 1]
    o_ref[...] = out.astype(o_ref.dtype)


def peptide_classifier_forward(x, w1, b1, w2, b2, *, tile_b=None,
                               compute_dtype=jnp.bfloat16,
                               vmem_budget_bytes=12 * 1024 * 1024):
    """x: [B, in_dim]. Weights stored as [in, out] / [1, out]. Returns [B, 1] f32."""
    B, in_dim = x.shape
    hidden = w1.shape[1]
    itemsize = jnp.dtype(compute_dtype).itemsize

    # Cast activations/weights for the matmul stream (ideally this cast lives upstream,
    # fused with the producer of x, so it doesn't cost an extra HBM pass).
    x_c = x if x.dtype == compute_dtype else x.astype(compute_dtype)

    # Tiny-batch guard: keep the block's first dim <= the array dim (pad is negligible).
    B_eff = B
    if B < 128:
        x_c = jnp.pad(x_c, ((0, 128 - B), (0, 0)))
        B_eff = 128

    # Tile selection: biggest multiple of 128 that fits the VMEM budget
    # (2x double-buffered lane-padded x tile + f32 h temp + output), then clamp so the
    # grid keeps >= 2 steps (v7x has 2 TensorCores; a length-1 parallel grid idles one).
    if tile_b is None:
        per_row = 2 * 128 * itemsize + 128 * 4 + 2 * 4
        tile_b = (vmem_budget_bytes // per_row)
    tile_b = max(128, (int(tile_b) // 128) * 128)
    tile_b = min(tile_b, max(128, _round_up(pl.cdiv(B_eff, 2), 128)))

    grid = (pl.cdiv(B_eff, tile_b),)  # ragged last block: OOB rows are independent and
                                      # their (masked) outputs are discarded.

    w1_c = w1.astype(compute_dtype)                      # [in_dim, hidden]
    b1_c = b1.reshape(1, hidden).astype(jnp.float32)     # [1, hidden]
    w2_c = w2.reshape(1, hidden).astype(jnp.float32)     # [1, hidden]
    b2_c = b2.reshape(1, 1).astype(jnp.float32)          # [1, 1]

    flops = 2 * B * in_dim * hidden + 4 * B * hidden
    bytes_accessed = (B * in_dim * itemsize + B * 4
                      + in_dim * hidden * itemsize + (2 * hidden + 1) * 4)

    out = pl.pallas_call(
        _peptide_clf_kernel,
        out_shape=jax.ShapeDtypeStruct((B_eff, 1), jnp.float32),
        grid_spec=pltpu.PrefetchScalarGridSpec(
            num_scalar_prefetch=0,
            grid=grid,
            in_specs=[
                pl.BlockSpec((tile_b, in_dim), lambda i: (i, 0)),   # contiguous x tile
                pl.BlockSpec((in_dim, hidden), lambda i: (0, 0)),   # W1 (full, constant)
                pl.BlockSpec((1, hidden), lambda i: (0, 0)),        # b1
                pl.BlockSpec((1, hidden), lambda i: (0, 0)),        # W2 row
                pl.BlockSpec((1, 1), lambda i: (0, 0)),             # b2
            ],
            out_specs=pl.BlockSpec((tile_b, 1), lambda i: (i, 0)),
        ),
        compiler_params=pltpu.CompilerParams(
            dimension_semantics=("parallel",),
        ),
        cost_estimate=pl.CostEstimate(
            flops=int(flops), transcendentals=0, bytes_accessed=int(bytes_accessed)),
    )(x_c, w1_c, b1_c, w2_c, b2_c)

    if B_eff != B:
        out = out[:B]
    return out                                            # [B, 1] f32


def init_params(key, in_dim=76, hidden=32):
    """Deterministic synthetic init (mimics PyTorch Linear uniform ranges)."""
    k1, k2, k3, k4 = jax.random.split(key, 4)
    lim1 = 1.0 / jnp.sqrt(in_dim)
    lim2 = 1.0 / jnp.sqrt(hidden)
    # Stored as [in_features, out_features] (transposed vs. PyTorch's [out, in]).
    w1 = jax.random.uniform(k1, (in_dim, hidden), jnp.float32, -lim1, lim1)
    b1 = jax.random.uniform(k2, (1, hidden), jnp.float32, -lim1, lim1)
    w2 = jax.random.uniform(k3, (hidden, 1), jnp.float32, -lim2, lim2)
    b2 = jax.random.uniform(k4, (1, 1), jnp.float32, -lim2, lim2)
    return w1, b1, w2, b2


if __name__ == "__main__":
    pep_dim, latent_dim, hidden = 12, 64, 32
    in_dim = pep_dim + latent_dim          # add_pep=True -> 76

    key = jax.random.PRNGKey(0)
    kx, kp = jax.random.split(key)
    w1, b1, w2, b2 = init_params(kp, in_dim, hidden)

    # Exercise both an aligned batch and a ragged last block (B not multiple of 128).
    for batch in (256, 200):
        x = jax.random.normal(jax.random.fold_in(kx, batch), (batch, in_dim), jnp.float32)
        ref = jnp.maximum(x @ w1 + b1, 0.0) @ w2 + b2

        # f32 path: exact match vs. plain-JAX reference.
        out_f32 = peptide_classifier_forward(x, w1, b1, w2, b2,
                                             compute_dtype=jnp.float32)
        out_f32 = jax.block_until_ready(out_f32)
        assert out_f32.shape == (batch, 1)
        assert jnp.allclose(out_f32, ref, atol=1e-5, rtol=1e-5)

        # Default bf16-activation path (halves dominant HBM traffic); looser tolerance
        # because x/W1 are cast to bf16 before a 76-deep contraction (f32 accumulation).
        out_bf16 = peptide_classifier_forward(x, w1, b1, w2, b2)
        out_bf16 = jax.block_until_ready(out_bf16)
        assert out_bf16.shape == (batch, 1)
        assert jnp.allclose(out_bf16, ref, atol=1e-1, rtol=1e-1)

    print("KERNEL_OK")
</pallas_src>

<mosaic_0001>
module attributes {stable_mosaic.version = 11 : i64} {
  func.func @_peptide_clf_kernel(%arg0: i32, %arg1: memref<128x76xf32, #tpu.memory_space<vmem>>, %arg2: memref<76x32xf32, #tpu.memory_space<vmem>>, %arg3: memref<1x32xf32, #tpu.memory_space<vmem>>, %arg4: memref<1x32xf32, #tpu.memory_space<vmem>>, %arg5: memref<1x1xf32, #tpu.memory_space<vmem>>, %arg6: memref<128x1xf32, #tpu.memory_space<vmem>>) attributes {dimension_semantics = [#tpu.dimension_semantics<parallel>], iteration_bounds = array<i64: 2>, scalar_prefetch = 0 : i64, scratch_operands = 0 : i64, tpu.core_type = #tpu.core_type<tc>, window_params = [{transform_indices = @transform_0, window_bounds = array<i64: 128, 76>}, {pipeline_mode = #tpu.pipeline_mode<synchronous>, transform_indices = @transform_1, window_bounds = array<i64: 76, 32>}, {pipeline_mode = #tpu.pipeline_mode<synchronous>, transform_indices = @transform_2, window_bounds = array<i64: 1, 32>}, {pipeline_mode = #tpu.pipeline_mode<synchronous>, transform_indices = @transform_3, window_bounds = array<i64: 1, 32>}, {pipeline_mode = #tpu.pipeline_mode<synchronous>, transform_indices = @transform_4, window_bounds = array<i64: 1, 1>}, {transform_indices = @transform_5, window_bounds = array<i64: 128, 1>}]} {
    %c0 = arith.constant 0 : index
    %c0_0 = arith.constant 0 : index
    %0 = vector.load %arg1[%c0, %c0_0] : memref<128x76xf32, #tpu.memory_space<vmem>>, vector<128x76xf32>
    %c0_1 = arith.constant 0 : index
    %c0_2 = arith.constant 0 : index
    %1 = vector.load %arg2[%c0_1, %c0_2] : memref<76x32xf32, #tpu.memory_space<vmem>>, vector<76x32xf32>
    %cst = arith.constant dense<0.000000e+00> : vector<128x32xf32>
    %2 = tpu.matmul %0, %1, %cst {dimension_numbers = #tpu.dot_dimension_numbers<[1], [0], [0], [1], [0, 0, 1, 1], [], []>} : vector<128x76xf32>, vector<76x32xf32>, vector<128x32xf32> -> vector<128x32xf32>
    %c0_3 = arith.constant 0 : index
    %c0_4 = arith.constant 0 : index
    %3 = vector.load %arg3[%c0_3, %c0_4] : memref<1x32xf32, #tpu.memory_space<vmem>>, vector<1x32xf32>
    %4 = vector.broadcast %3 : vector<1x32xf32> to vector<128x32xf32>
    %5 = arith.addf %2, %4 : vector<128x32xf32>
    %cst_5 = arith.constant 0.000000e+00 : f32
    %6 = vector.broadcast %cst_5 : f32 to vector<128x32xf32>
    %7 = arith.maximumf %5, %6 : vector<128x32xf32>
    %c0_6 = arith.constant 0 : index
    %c0_7 = arith.constant 0 : index
    %8 = vector.load %arg4[%c0_6, %c0_7] : memref<1x32xf32, #tpu.memory_space<vmem>>, vector<1x32xf32>
    %9 = vector.broadcast %8 : vector<1x32xf32> to vector<128x32xf32>
    %10 = arith.mulf %7, %9 : vector<128x32xf32>
    %cst_8 = arith.constant dense<0.000000e+00> : vector<128xf32>
    %11 = vector.multi_reduction <add>, %10, %cst_8 [1] : vector<128x32xf32> to vector<128xf32>
    %12 = vector.shape_cast %11 : vector<128xf32> to vector<128x1xf32>
    %c0_9 = arith.constant 0 : index
    %c0_10 = arith.constant 0 : index
    %13 = vector.load %arg5[%c0_9, %c0_10] : memref<1x1xf32, #tpu.memory_space<vmem>>, vector<1x1xf32>
    %14 = vector.broadcast %13 : vector<1x1xf32> to vector<128x1xf32>
    %15 = arith.addf %12, %14 : vector<128x1xf32>
    %c0_11 = arith.constant 0 : index
    %c0_12 = arith.constant 0 : index
    %16 = vector.load %arg6[%c0_11, %c0_12] : memref<128x1xf32, #tpu.memory_space<vmem>>, vector<128x1xf32>
    tpu.vector_store %arg6[%c0_11, %c0_12], %15 {strides = array<i32>} : memref<128x1xf32, #tpu.memory_space<vmem>>, vector<128x1xf32>,
    return
  }
  func.func @transform_0(%arg0: i32) -> (i32, i32) {
    %c0_i32 = arith.constant 0 : i32
    %c0_i32_0 = arith.constant 0 : i32
    return %arg0, %c0_i32 : i32, i32
  }
  func.func @transform_1(%arg0: i32) -> (i32, i32) {
    %c0_i32 = arith.constant 0 : i32
    %c0_i32_0 = arith.constant 0 : i32
    %c0_i32_1 = arith.constant 0 : i32
    return %c0_i32, %c0_i32_0 : i32, i32
  }
  func.func @transform_2(%arg0: i32) -> (i32, i32) {
    %c0_i32 = arith.constant 0 : i32
    %c0_i32_0 = arith.constant 0 : i32
    %c0_i32_1 = arith.constant 0 : i32
    return %c0_i32, %c0_i32_0 : i32, i32
  }
  func.func @transform_3(%arg0: i32) -> (i32, i32) {
    %c0_i32 = arith.constant 0 : i32
    %c0_i32_0 = arith.constant 0 : i32
    %c0_i32_1 = arith.constant 0 : i32
    return %c0_i32, %c0_i32_0 : i32, i32
  }
  func.func @transform_4(%arg0: i32) -> (i32, i32) {
    %c0_i32 = arith.constant 0 : i32
    %c0_i32_0 = arith.constant 0 : i32
    %c0_i32_1 = arith.constant 0 : i32
    return %c0_i32, %c0_i32_0 : i32, i32
  }
  func.func @transform_5(%arg0: i32) -> (i32, i32) {
    %c0_i32 = arith.constant 0 : i32
    %c0_i32_0 = arith.constant 0 : i32
    return %arg0, %c0_i32 : i32, i32
  }
}

</mosaic_0001>

<llo_original>
// kernel: tpu_custom_call.1
$region0: #{tpu_custom_call.1}
  #allocation0 [shape = 'u32[]', space=smem, size = 0x4, offset = 0x4, fixed_abs, tag = 'smem constant byte address 0x4 - core index']
  #allocation1 [shape = 'u32[144,128]{1,0:T(1,128)}', space=vmem, size = 0x12000, scoped, tag = 'internal scratch']
  #allocation2 [shape = 'f32[1,1]{1,0:T(1,128)S(1)}', space=vmem, size = 0x200, scoped, tag = 'scoped memory for tpu_custom_call.1']
  %s0 = inlined_call_operand.vmem [shape: f32[256,76], index: 0, kind: input, shape index: {}]
  %s1 = inlined_call_operand.vmem [shape: f32[76,32], index: 1, kind: input, shape index: {}]
  %s2 = inlined_call_operand.vmem [shape: f32[1,32], index: 2, kind: input, shape index: {}]
  %s3 = inlined_call_operand.vmem [shape: f32[1,32], index: 3, kind: input, shape index: {}]
  %s4 = inlined_call_operand.<no memory space> [shape: f32[1,1], index: 4, kind: input, shape index: {}]
  %s5 = inlined_call_operand.vmem [shape: f32[256,1], index: 5, kind: output, shape index: {}]
  %s6 = sld [smem:[#allocation0]]
  $region53: #{tpu_custom_call.1} parent=0
    _
  %s8 = ssub.s32 1, %s6
  %s9 = scalar_select 0, %s8, %s6
  %v10 = vstv %s4
  %11 = vst [vmem:[#allocation2] sm:$0x1] %v10
  loop: start=0, step=1, limit=4
  $region2: #{tpu_custom_call.1} parent=0 // loop_pre_header
    _
  $region3: #{tpu_custom_call.1} parent=0 // loop_header
    %s13 = sphi 0, %s17
    %p14 = scmp.ge.s32.totalorder %s13, 4
    %s23 = sphi 0, %s25
    %s26 = sphi 0, %s23
    %s27 = sphi 0, %s26
    %s43 = sphi 0, %s27
    %s47 = sphi 0, %s47
    %s49 = sphi 0, %s47
    %s50 = sphi 0, %s49
    %s64 = sphi 0, %s50
    %s68 = sphi 0, %s68
    %s70 = sphi 0, %s68
    %s71 = sphi 0, %s70
    %s85 = sphi 0, %s71
    %s89 = sphi 0, %s89
    %s91 = sphi 0, %s89
    %s92 = sphi 0, %s91
    %s106 = sphi 0, %s92
    %s110 = sphi 0, %s110
    %s112 = sphi 0, %s110
    %s113 = sphi 0, %s112
    %s127 = sphi 0, %s113
    %s133 = sphi 0, %s135
    %s136 = sphi 0, %s133
    %s137 = sphi 0, %s136
    %s153 = sphi 0, %s137
  $region4: #{tpu_custom_call.1} parent=0 // loop_header_branch
    %16 = sbr.rel (%p14) target = $region8
  $region5: #{tpu_custom_call.1} parent=0 // loop_body
    %s18 = ssub.s32 %s13, 1
    %s19 = ssub.s32 %s13, 2
    %s20 = sadd.s32 %s13, 1
    %s21 = ssub.s32 %s13, %s20
    %p22 = scmp.eq.s32.totalorder %s21, 0
    %s24 = sadd.s32 %s23, 1
    %s25 = scalar_select %p22, %s23, %s24
    %p28 = pneg %p22
    %p29 = scmp.eq.s32.totalorder %s13, 1
    %p30 = por %p28, %p29
    %p31 = scmp.ne.s32.totalorder %s23, %s26
    %p32 = scmp.eq.s32.totalorder %s13, 0
    %p33 = por %p31, %p32
    %p34 = scmp.ne.s32.totalorder %s23, %s26
    %p35 = scmp.eq.s32.totalorder %s18, 1
    %p36 = por %p34, %p35
    %p37 = scmp.ne.s32.totalorder %s26, %s27
    %p38 = scmp.eq.s32.totalorder %s18, 0
    %p39 = por %p37, %p38
    %p40 = scmp.ne.s32.totalorder %s26, %s27
    %p41 = scmp.eq.s32.totalorder %s19, 1
    %p42 = por %p40, %p41
    %p44 = scmp.ne.s32.totalorder %s27, %s43
    %p45 = scmp.eq.s32.totalorder %s19, 0
    %p46 = por %p44, %p45
    %s48 = sadd.s32 %s47, 1
    %p51 = scmp.eq.s32.totalorder %s13, 1
    %p52 = scmp.ne.s32.totalorder %s47, %s49
    %p53 = scmp.eq.s32.totalorder %s13, 0
    %p54 = por %p52, %p53
    %p55 = scmp.ne.s32.totalorder %s47, %s49
    %p56 = scmp.eq.s32.totalorder %s18, 1
    %p57 = por %p55, %p56
    %p58 = scmp.ne.s32.totalorder %s49, %s50
    %p59 = scmp.eq.s32.totalorder %s18, 0
    %p60 = por %p58, %p59
    %p61 = scmp.ne.s32.totalorder %s49, %s50
    %p62 = scmp.eq.s32.totalorder %s19, 1
    %p63 = por %p61, %p62
    %p65 = scmp.ne.s32.totalorder %s50, %s64
    %p66 = scmp.eq.s32.totalorder %s19, 0
    %p67 = por %p65, %p66
    %s69 = sadd.s32 %s68, 1
    %p72 = scmp.eq.s32.totalorder %s13, 1
    %p73 = scmp.ne.s32.totalorder %s68, %s70
    %p74 = scmp.eq.s32.totalorder %s13, 0
    %p75 = por %p73, %p74
    %p76 = scmp.ne.s32.totalorder %s68, %s70
    %p77 = scmp.eq.s32.totalorder %s18, 1
    %p78 = por %p76, %p77
    %p79 = scmp.ne.s32.totalorder %s70, %s71
    %p80 = scmp.eq.s32.totalorder %s18, 0
    %p81 = por %p79, %p80
    %p82 = scmp.ne.s32.totalorder %s70, %s71
    %p83 = scmp.eq.s32.totalorder %s19, 1
    %p84 = por %p82, %p83
    %p86 = scmp.ne.s32.totalorder %s71, %s85
    %p87 = scmp.eq.s32.totalorder %s19, 0
    %p88 = por %p86, %p87
    %s90 = sadd.s32 %s89, 1
    %p93 = scmp.eq.s32.totalorder %s13, 1
    %p94 = scmp.ne.s32.totalorder %s89, %s91
    %p95 = scmp.eq.s32.totalorder %s13, 0
    %p96 = por %p94, %p95
    %p97 = scmp.ne.s32.totalorder %s89, %s91
    %p98 = scmp.eq.s32.totalorder %s18, 1
    %p99 = por %p97, %p98
    %p100 = scmp.ne.s32.totalorder %s91, %s92
    %p101 = scmp.eq.s32.totalorder %s18, 0
    %p102 = por %p100, %p101
    %p103 = scmp.ne.s32.totalorder %s91, %s92
    %p104 = scmp.eq.s32.totalorder %s19, 1
    %p105 = por %p103, %p104
    %p107 = scmp.ne.s32.totalorder %s92, %s106
    %p108 = scmp.eq.s32.totalorder %s19, 0
    %p109 = por %p107, %p108
    %s111 = sadd.s32 %s110, 1
    %p114 = scmp.eq.s32.totalorder %s13, 1
    %p115 = scmp.ne.s32.totalorder %s110, %s112
    %p116 = scmp.eq.s32.totalorder %s13, 0
    %p117 = por %p115, %p116
    %p118 = scmp.ne.s32.totalorder %s110, %s112
    %p119 = scmp.eq.s32.totalorder %s18, 1
    %p120 = por %p118, %p119
    %p121 = scmp.ne.s32.totalorder %s112, %s113
    %p122 = scmp.eq.s32.totalorder %s18, 0
    %p123 = por %p121, %p122
    %p124 = scmp.ne.s32.totalorder %s112, %s113
    %p125 = scmp.eq.s32.totalorder %s19, 1
    %p126 = por %p124, %p125
    %p128 = scmp.ne.s32.totalorder %s113, %s127
    %p129 = scmp.eq.s32.totalorder %s19, 0
    %p130 = por %p128, %p129
    %s131 = ssub.s32 %s13, %s20
    %p132 = scmp.eq.s32.totalorder %s131, 0
    %s134 = sadd.s32 %s133, 1
    %s135 = scalar_select %p132, %s133, %s134
    %p138 = pneg %p132
    %p139 = scmp.eq.s32.totalorder %s13, 1
    %p140 = por %p138, %p139
    %p141 = scmp.ne.s32.totalorder %s133, %s136
    %p142 = scmp.eq.s32.totalorder %s13, 0
    %p143 = por %p141, %p142
    %p144 = scmp.ne.s32.totalorder %s133, %s136
    %p145 = scmp.eq.s32.totalorder %s18, 1
    %p146 = por %p144, %p145
    %p147 = scmp.ne.s32.totalorder %s136, %s137
    %p148 = scmp.eq.s32.totalorder %s18, 0
    %p149 = por %p147, %p148
    %p150 = scmp.ne.s32.totalorder %s136, %s137
    %p151 = scmp.eq.s32.totalorder %s19, 1
    %p152 = por %p150, %p151
    %p154 = scmp.ne.s32.totalorder %s137, %s153
    %p155 = scmp.eq.s32.totalorder %s19, 0
    %p156 = por %p154, %p155
    %p157 = scmp.le.s32.totalorder 1, %s13
    %p158 = scmp.lt.s32.totalorder %s13, 3
    %p159 = pnand %p157, %p158
    %p160 = pneg %p159
    // Predicated region
    $region9: #{tpu_custom_call.1} parent=5 // pred_check
      _
    $region10: #{tpu_custom_call.1} parent=5 // pred_check_branch
      %162 = sbr.rel (%p159) target = $region12
    $region11: #{tpu_custom_call.1} parent=5 // pred_region
      %s163 = ssub.s32 %s13, 1
      // Predicated region
      $region13: #{tpu_custom_call.1} parent=11 // pred_check
        %p164 = pneg %p60
      $region14: #{tpu_custom_call.1} parent=11 // pred_check_branch
        %166 = sbr.rel (%p164) target = $region16
      $region15: #{tpu_custom_call.1} parent=11 // pred_region
        _
      $region16: #{tpu_custom_call.1} parent=11 // pred_fallthru
        _
      // Predicated region
      $region17: #{tpu_custom_call.1} parent=11 // pred_check
        %p167 = pneg %p81
      $region18: #{tpu_custom_call.1} parent=11 // pred_check_branch
        %169 = sbr.rel (%p167) target = $region20
      $region19: #{tpu_custom_call.1} parent=11 // pred_region
        _
      $region20: #{tpu_custom_call.1} parent=11 // pred_fallthru
        _
      // Predicated region
      $region21: #{tpu_custom_call.1} parent=11 // pred_check
        %p170 = pneg %p102
      $region22: #{tpu_custom_call.1} parent=11 // pred_check_branch
        %172 = sbr.rel (%p170) target = $region24
      $region23: #{tpu_custom_call.1} parent=11 // pred_region
        _
      $region24: #{tpu_custom_call.1} parent=11 // pred_fallthru
        _
      // Predicated region
      $region25: #{tpu_custom_call.1} parent=11 // pred_check
        %p173 = pneg %p123
      $region26: #{tpu_custom_call.1} parent=11 // pred_check_branch
        %175 = sbr.rel (%p173) target = $region28
      $region27: #{tpu_custom_call.1} parent=11 // pred_region
        _
      $region28: #{tpu_custom_call.1} parent=11 // pred_fallthru
        _
    $region12: #{tpu_custom_call.1} parent=5 // pred_fallthru
      _
    %p176 = scmp.lt.s32.totalorder %s13, 2
    // Predicated region
    $region29: #{tpu_custom_call.1} parent=5 // pred_check
      %p177 = pneg %p176
    $region30: #{tpu_custom_call.1} parent=5 // pred_check_branch
      %179 = sbr.rel (%p177) target = $region32
    $region31: #{tpu_custom_call.1} parent=5 // pred_region
      // Predicated region
      $region33: #{tpu_custom_call.1} parent=31 // pred_check
        %p180 = pneg %p33
      $region34: #{tpu_custom_call.1} parent=31 // pred_check_branch
        %182 = sbr.rel (%p180) target = $region36
      $region35: #{tpu_custom_call.1} parent=31 // pred_region
        %s183 = smul.u32 16, %s13
        %p184 = scmp.lt.s32.totalorder %s183, 31
        %s185 = scalar_select %p184, %s183, 31
        %s186 = smul.addr %s185, 8
        %s187 = scalar_lea.vmem %s0, %s186
        %s188 = smul.u32 16, %s13
      $region36: #{tpu_custom_call.1} parent=31 // pred_fallthru
        _
    $region32: #{tpu_custom_call.1} parent=5 // pred_fallthru
      _
    %p189 = scmp.le.s32.totalorder 1, %s13
    %p190 = scmp.lt.s32.totalorder %s13, 3
    %p191 = pnand %p189, %p190
    %p192 = pneg %p191
    // Predicated region
    $region37: #{tpu_custom_call.1} parent=5 // pred_check
      _
    $region38: #{tpu_custom_call.1} parent=5 // pred_check_branch
      %194 = sbr.rel (%p191) target = $region40
    $region39: #{tpu_custom_call.1} parent=5 // pred_region
      %s195 = ssub.s32 %s13, 1
      %s196 = smul.u32 16, %s18
      %p197 = scmp.lt.s32.totalorder %s196, 31
      %s198 = scalar_select %p197, %s196, 31
      %s199 = smul.addr %s198, 8
      %s200 = scalar_lea.vmem %s0, %s199
      %p201 = pneg %p39
      %p202 = pneg %p36
      %p203 = pneg %p60
      %p204 = pneg %p57
      %p205 = pneg %p81
      %p206 = pneg %p78
      %p207 = pneg %p102
      %p208 = pneg %p99
      %p209 = pneg %p123
      %p210 = pneg %p120
      %p211 = pneg %p149
      %p212 = pneg %p146
      %s213 = smul.u32 16, %s18
      %p214 = scmp.lt.s32.totalorder %s213, 31
      %s215 = scalar_select %p214, %s213, 31
      %s216 = smul.addr %s215, 8
      %s217 = scalar_lea.vmem %s5, %s216
      %s218 = smul.u32 16, %s18
      %p219 = scmp.lt.s32.totalorder %s218, 31
      %s220 = scalar_select %p219, %s218, 31
      %s221 = smul.addr %s220, 8
      %s222 = scalar_lea.vmem %s0, %s221
      %s223 = smul.u32 16, %s18
      %s224 = smul.u32 16, %s18
      %p225 = scmp.lt.s32.totalorder %s224, 31
      %s226 = scalar_select %p225, %s224, 31
      %s227 = smul.addr %s226, 8
      %s228 = scalar_lea.vmem %s5, %s227
      %s229 = smul.u32 16, %s18
      %v230 = vld [vmem:[%s222] sm:$0xff]
      %v231 = vld [vmem:[%s222 + $0x8] sm:$0xff]
      %v232 = vld [vmem:[%s222 + $0x10] sm:$0xff]
      %v233 = vld [vmem:[%s222 + $0x18] sm:$0xff]
      %v234 = vld [vmem:[%s222 + $0x20] sm:$0xff]
      %v235 = vld [vmem:[%s222 + $0x28] sm:$0xff]
      %v236 = vld [vmem:[%s222 + $0x30] sm:$0xff]
      %v237 = vld [vmem:[%s222 + $0x38] sm:$0xff]
      %v238 = vld [vmem:[%s222 + $0x40] sm:$0xff]
      %v239 = vld [vmem:[%s222 + $0x48] sm:$0xff]
      %v240 = vld [vmem:[%s222 + $0x50] sm:$0xff]
      %v241 = vld [vmem:[%s222 + $0x58] sm:$0xff]
      %v242 = vld [vmem:[%s222 + $0x60] sm:$0xff]
      %v243 = vld [vmem:[%s222 + $0x68] sm:$0xff]
      %v244 = vld [vmem:[%s222 + $0x70] sm:$0xff]
      %v245 = vld [vmem:[%s222 + $0x78] sm:$0xff]
      %v246 = vld [vmem:[%s1] sm:$0xff]
      %v247 = vld [vmem:[%s1 + $0x8] sm:$0xff]
      %v248 = vld [vmem:[%s1 + $0x10] sm:$0xff]
      %v249 = vld [vmem:[%s1 + $0x18] sm:$0xff]
      %v250 = vld [vmem:[%s1 + $0x20] sm:$0xff]
      %v251 = vld [vmem:[%s1 + $0x28] sm:$0xff]
      %v252 = vld [vmem:[%s1 + $0x30] sm:$0xff]
      %v253 = vld [vmem:[%s1 + $0x38] sm:$0xff]
      %v254 = vld [vmem:[%s1 + $0x40] sm:$0xff]
      %v255 = vld [vmem:[%s1 + $0x48] sm:$0xf]
      %v256 = vld [vmem:[%s2] sm:$0x1]
      %v258 = vlaneseq
      %v259 = vshrl.u32 %v258, 7
      %v260 = vsub.s32 0, %v259
      %v261 = vrot.slane %v256, %v260
      %vm263 = vcmask 621568
      %v265 = vsel %vm263, %v230, 0
      %v268 = vsel %vm263, %v231, 0
      %v271 = vsel %vm263, %v232, 0
      %v274 = vsel %vm263, %v233, 0
      %v277 = vsel %vm263, %v234, 0
      %v280 = vsel %vm263, %v235, 0
      %v283 = vsel %vm263, %v236, 0
      %v286 = vsel %vm263, %v237, 0
      %v289 = vsel %vm263, %v238, 0
      %v292 = vsel %vm263, %v239, 0
      %v295 = vsel %vm263, %v240, 0
      %v298 = vsel %vm263, %v241, 0
      %v301 = vsel %vm263, %v242, 0
      %v304 = vsel %vm263, %v243, 0
      %v307 = vsel %vm263, %v244, 0
      %v310 = vsel %vm263, %v245, 0
      %vm312 = vcmask 1043456
      %v314 = vsel %vm312, %v255, 0
      %316 = vmatprep.subr.mxu0 0.0
      %317 = vmatpush1.msra.mxu0 %v246
      %318 = vmatprep.subr.mxu0 0.0
      %319 = vmatpush1.msra.mxu0 %v247
      %320 = vmatprep.subr.mxu0 0.0
      %321 = vmatpush1.msra.mxu0 %v248
      %322 = vmatprep.subr.mxu0 0.0
      %323 = vmatpush1.msra.mxu0 %v249
      %324 = vmatprep.subr.mxu0 0.0
      %325 = vmatpush1.msra.mxu0 %v250
      %326 = vmatprep.subr.mxu0 0.0
      %327 = vmatpush1.msra.mxu0 %v251
      %328 = vmatprep.subr.mxu0 0.0
      %329 = vmatpush1.msra.mxu0 %v252
      %330 = vmatprep.subr.mxu0 0.0
      %331 = vmatpush1.msra.mxu0 %v253
      %332 = vmatprep.subr.mxu0 0.0
      %333 = vmatpush1.msra.mxu0 %v254
      %334 = vmatprep.subr.mxu0 0.0
      %335 = vmatpush1.msra.mxu0 %v314
      %336 = vmatprep.subr.mxu0 0.0
      %337 = vmatpush1.msra.mxu0 0.0
      %338 = vmatprep.subr.mxu0 0.0
      %339 = vmatpush1.msra.mxu0 0.0
      %340 = vmatprep.subr.mxu0 0.0
      %341 = vmatpush1.msra.mxu0 0.0
      %342 = vmatprep.subr.mxu0 0.0
      %343 = vmatpush1.msra.mxu0 0.0
      %344 = vmatprep.subr.mxu0 0.0
      %345 = vmatpush1.msra.mxu0 0.0
      %346 = vmatprep.subr.mxu0 0.0
      %347 = vmatpush1.msra.mxu0 0.0
      %348 = vmatprep.subr.mxu0 0.0
      %349 = vmatpush1.msra.mxu0 0.0
      %350 = vmatprep.subr.mxu0 0.0
      %351 = vmatpush1.msra.mxu0 0.0
      %352 = vmatprep.subr.mxu0 0.0
      %353 = vmatpush1.msra.mxu0 0.0
      %354 = vmatprep.subr.mxu0 0.0
      %355 = vmatpush1.msra.mxu0 0.0
      %356 = vmatprep.subr.mxu0 0.0
      %357 = vmatpush1.msra.mxu0 0.0
      %358 = vmatprep.subr.mxu0 0.0
      %359 = vmatpush1.msra.mxu0 0.0
      %360 = vmatprep.subr.mxu0 0.0
      %361 = vmatpush1.msra.mxu0 0.0
      %362 = vmatprep.subr.mxu0 0.0
      %363 = vmatpush1.msra.mxu0 0.0
      %364 = vmatprep.subr.mxu0 0.0
      %365 = vmatpush1.msra.mxu0 0.0
      %366 = vmatprep.subr.mxu0 0.0
      %367 = vmatpush1.msra.mxu0 0.0
      %368 = vmatprep.subr.mxu0 0.0
      %369 = vmatpush1.msra.mxu0 0.0
      %370 = vmatprep.subr.mxu0 0.0
      %371 = vmatpush1.msra.mxu0 0.0
      %372 = vmatprep.subr.mxu0 0.0
      %373 = vmatpush1.msra.mxu0 0.0
      %374 = vmatprep.subr.mxu0 0.0
      %375 = vmatpush1.msra.mxu0 0.0
      %376 = vmatprep.subr.mxu0 0.0
      %377 = vmatpush1.msra.mxu0 0.0
      %378 = vmatprep.subr.mxu0 0.0
      %379 = vmatpush1.msra.mxu0 0.0
      %380 = vmatprep.mubr.f32.mxu0 0.0
      %381 = vmatmul.mubr.f32.gmra.mrb[0].mxu0 %v265
      %v382 = vpop.f32.mrb[0].mxu0
      %v383 = vadd.f32 %v261, %v382
      %v384 = vpop.f32.mrb[0].mxu0
      %385 = vmatprep.mubr.f32.mxu0 0.0
      %386 = vmatmul.mubr.f32.gmra.mrb[0].mxu0 %v268
      %v387 = vpop.f32.mrb[0].mxu0
      %v388 = vadd.f32 %v261, %v387
      %v389 = vpop.f32.mrb[0].mxu0
      %390 = vmatprep.mubr.f32.mxu0 0.0
      %391 = vmatmul.mubr.f32.gmra.mrb[0].mxu0 %v271
      %v392 = vpop.f32.mrb[0].mxu0
      %v393 = vadd.f32 %v261, %v392
      %v394 = vpop.f32.mrb[0].mxu0
      %395 = vmatprep.mubr.f32.mxu0 0.0
      %396 = vmatmul.mubr.f32.gmra.mrb[0].mxu0 %v274
      %v397 = vpop.f32.mrb[0].mxu0
      %v398 = vadd.f32 %v261, %v397
      %v399 = vpop.f32.mrb[0].mxu0
      %400 = vmatprep.mubr.f32.mxu0 0.0
      %401 = vmatmul.mubr.f32.gmra.mrb[0].mxu0 %v277
      %v402 = vpop.f32.mrb[0].mxu0
      %v403 = vadd.f32 %v261, %v402
      %v404 = vpop.f32.mrb[0].mxu0
      %405 = vmatprep.mubr.f32.mxu0 0.0
      %406 = vmatmul.mubr.f32.gmra.mrb[0].mxu0 %v280
      %v407 = vpop.f32.mrb[0].mxu0
      %v408 = vadd.f32 %v261, %v407
      %v409 = vpop.f32.mrb[0].mxu0
      %410 = vmatprep.mubr.f32.mxu0 0.0
      %411 = vmatmul.mubr.f32.gmra.mrb[0].mxu0 %v283
      %v412 = vpop.f32.mrb[0].mxu0
      %v413 = vadd.f32 %v261, %v412
      %v414 = vpop.f32.mrb[0].mxu0
      %415 = vmatprep.mubr.f32.mxu0 0.0
      %416 = vmatmul.mubr.f32.gmra.mrb[0].mxu0 %v286
      %v417 = vpop.f32.mrb[0].mxu0
      %v418 = vadd.f32 %v261, %v417
      %v419 = vpop.f32.mrb[0].mxu0
      %420 = vmatprep.mubr.f32.mxu0 0.0
      %421 = vmatmul.mubr.f32.gmra.mrb[0].mxu0 %v289
      %v422 = vpop.f32.mrb[0].mxu0
      %v423 = vadd.f32 %v261, %v422
      %v424 = vpop.f32.mrb[0].mxu0
      %425 = vmatprep.mubr.f32.mxu0 0.0
      %426 = vmatmul.mubr.f32.gmra.mrb[0].mxu0 %v292
      %v427 = vpop.f32.mrb[0].mxu0
      %v428 = vadd.f32 %v261, %v427
      %v429 = vpop.f32.mrb[0].mxu0
      %430 = vmatprep.mubr.f32.mxu0 0.0
      %431 = vmatmul.mubr.f32.gmra.mrb[0].mxu0 %v295
      %v432 = vpop.f32.mrb[0].mxu0
      %v433 = vadd.f32 %v261, %v432
      %v434 = vpop.f32.mrb[0].mxu0
      %435 = vmatprep.mubr.f32.mxu0 0.0
      %436 = vmatmul.mubr.f32.gmra.mrb[0].mxu0 %v298
      %v437 = vpop.f32.mrb[0].mxu0
      %v438 = vadd.f32 %v261, %v437
      %v439 = vpop.f32.mrb[0].mxu0
      %440 = vmatprep.mubr.f32.mxu0 0.0
      %441 = vmatmul.mubr.f32.gmra.mrb[0].mxu0 %v301
      %v442 = vpop.f32.mrb[0].mxu0
      %v443 = vadd.f32 %v261, %v442
      %v444 = vpop.f32.mrb[0].mxu0
      %445 = vmatprep.mubr.f32.mxu0 0.0
      %446 = vmatmul.mubr.f32.gmra.mrb[0].mxu0 %v304
      %v447 = vpop.f32.mrb[0].mxu0
      %v448 = vadd.f32 %v261, %v447
      %v449 = vpop.f32.mrb[0].mxu0
      %450 = vmatprep.mubr.f32.mxu0 0.0
      %451 = vmatmul.mubr.f32.gmra.mrb[0].mxu0 %v307
      %v452 = vpop.f32.mrb[0].mxu0
      %v453 = vadd.f32 %v261, %v452
      %v454 = vpop.f32.mrb[0].mxu0
      %455 = vmatprep.mubr.f32.mxu0 0.0
      %456 = vmatmul.mubr.f32.gmra.mrb[0].mxu0 %v310
      %v457 = vpop.f32.mrb[0].mxu0
      %v458 = vadd.f32 %v261, %v457
      %v459 = vpop.f32.mrb[0].mxu0
      %460 = vdwg.mxu0
      %v461 = vmax.f32 %v383, 0.0
      %v462 = vmax.f32 %v388, 0.0
      %v463 = vmax.f32 %v393, 0.0
      %v464 = vmax.f32 %v398, 0.0
      %v465 = vmax.f32 %v403, 0.0
      %v466 = vmax.f32 %v408, 0.0
      %v467 = vmax.f32 %v413, 0.0
      %v468 = vmax.f32 %v418, 0.0
      %v469 = vmax.f32 %v423, 0.0
      %v470 = vmax.f32 %v428, 0.0
      %v471 = vmax.f32 %v433, 0.0
      %v472 = vmax.f32 %v438, 0.0
      %v473 = vmax.f32 %v443, 0.0
      %v474 = vmax.f32 %v448, 0.0
      %v475 = vmax.f32 %v453, 0.0
      %v476 = vmax.f32 %v458, 0.0
      %v477 = vld [vmem:[%s3] sm:$0x1]
      %v479 = vlaneseq
      %v480 = vshrl.u32 %v479, 7
      %v481 = vsub.s32 0, %v480
      %v482 = vrot.slane %v477, %v481
      %v484 = vmul.f32 %v461, %v482
      %v485 = vmul.f32 %v462, %v482
      %v486 = vmul.f32 %v463, %v482
      %v487 = vmul.f32 %v464, %v482
      %v488 = vmul.f32 %v465, %v482
      %v489 = vmul.f32 %v466, %v482
      %v490 = vmul.f32 %v467, %v482
      %v491 = vmul.f32 %v468, %v482
      %v492 = vmul.f32 %v469, %v482
      %v493 = vmul.f32 %v470, %v482
      %v494 = vmul.f32 %v471, %v482
      %v495 = vmul.f32 %v472, %v482
      %v496 = vmul.f32 %v473, %v482
      %v497 = vmul.f32 %v474, %v482
      %v498 = vmul.f32 %v475, %v482
      %v499 = vmul.f32 %v476, %v482
      %vm500 = vcmask 261120
      %v501 = vsel %vm500, %v484, 0.0
      %502 = vadd.xlane.f32.xlu0 %v501
      %v503 = vpop.xlane.xlu0 %502
      %v504 = vsel %vm500, %v485, 0.0
      %505 = vadd.xlane.f32.xlu0 %v504
      %v506 = vpop.xlane.xlu0 %505
      %v507 = vsel %vm500, %v486, 0.0
      %508 = vadd.xlane.f32.xlu0 %v507
      %v509 = vpop.xlane.xlu0 %508
      %v510 = vsel %vm500, %v487, 0.0
      %511 = vadd.xlane.f32.xlu0 %v510
      %v512 = vpop.xlane.xlu0 %511
      %v513 = vsel %vm500, %v488, 0.0
      %514 = vadd.xlane.f32.xlu0 %v513
      %v515 = vpop.xlane.xlu0 %514
      %v516 = vsel %vm500, %v489, 0.0
      %517 = vadd.xlane.f32.xlu0 %v516
      %v518 = vpop.xlane.xlu0 %517
      %v519 = vsel %vm500, %v490, 0.0
      %520 = vadd.xlane.f32.xlu0 %v519
      %v521 = vpop.xlane.xlu0 %520
      %v522 = vsel %vm500, %v491, 0.0
      %523 = vadd.xlane.f32.xlu0 %v522
      %v524 = vpop.xlane.xlu0 %523
      %v525 = vsel %vm500, %v492, 0.0
      %526 = vadd.xlane.f32.xlu0 %v525
      %v527 = vpop.xlane.xlu0 %526
      %v528 = vsel %vm500, %v493, 0.0
      %529 = vadd.xlane.f32.xlu0 %v528
      %v530 = vpop.xlane.xlu0 %529
      %v531 = vsel %vm500, %v494, 0.0
      %532 = vadd.xlane.f32.xlu0 %v531
      %v533 = vpop.xlane.xlu0 %532
      %v534 = vsel %vm500, %v495, 0.0
      %535 = vadd.xlane.f32.xlu0 %v534
      %v536 = vpop.xlane.xlu0 %535
      %v537 = vsel %vm500, %v496, 0.0
      %538 = vadd.xlane.f32.xlu0 %v537
      %v539 = vpop.xlane.xlu0 %538
      %v540 = vsel %vm500, %v497, 0.0
      %541 = vadd.xlane.f32.xlu0 %v540
      %v542 = vpop.xlane.xlu0 %541
      %v543 = vsel %vm500, %v498, 0.0
      %544 = vadd.xlane.f32.xlu0 %v543
      %v545 = vpop.xlane.xlu0 %544
      %v546 = vsel %vm500, %v499, 0.0
      %547 = vadd.xlane.f32.xlu0 %v546
      %v548 = vpop.xlane.xlu0 %547
      %v549 = vld [vmem:[#allocation2] sm:$0x1]
      %v551 = vlaneseq
      %v552 = vshrl.u32 %v551, 7
      %v553 = vsub.s32 0, %v552
      %v554 = vrot.slane %v549, %v553
      %v556 = vadd.f32 %v503, %v554
      %v557 = vadd.f32 %v506, %v554
      %v558 = vadd.f32 %v509, %v554
      %v559 = vadd.f32 %v512, %v554
      %v560 = vadd.f32 %v515, %v554
      %v561 = vadd.f32 %v518, %v554
      %v562 = vadd.f32 %v521, %v554
      %v563 = vadd.f32 %v524, %v554
      %v564 = vadd.f32 %v527, %v554
      %v565 = vadd.f32 %v530, %v554
      %v566 = vadd.f32 %v533, %v554
      %v567 = vadd.f32 %v536, %v554
      %v568 = vadd.f32 %v539, %v554
      %v569 = vadd.f32 %v542, %v554
      %v570 = vadd.f32 %v545, %v554
      %v571 = vadd.f32 %v548, %v554
      %vm572 = vcmask 7168
      %573 = vst.msk [vmem:[%s228] sm:$0xff] %vm572, %v556
      %574 = vst.msk [vmem:[%s228 + $0x8] sm:$0xff] %vm572, %v557
      %575 = vst.msk [vmem:[%s228 + $0x10] sm:$0xff] %vm572, %v558
      %576 = vst.msk [vmem:[%s228 + $0x18] sm:$0xff] %vm572, %v559
      %577 = vst.msk [vmem:[%s228 + $0x20] sm:$0xff] %vm572, %v560
      %578 = vst.msk [vmem:[%s228 + $0x28] sm:$0xff] %vm572, %v561
      %579 = vst.msk [vmem:[%s228 + $0x30] sm:$0xff] %vm572, %v562
      %580 = vst.msk [vmem:[%s228 + $0x38] sm:$0xff] %vm572, %v563
      %581 = vst.msk [vmem:[%s228 + $0x40] sm:$0xff] %vm572, %v564
      %582 = vst.msk [vmem:[%s228 + $0x48] sm:$0xff] %vm572, %v565
      %583 = vst.msk [vmem:[%s228 + $0x50] sm:$0xff] %vm572, %v566
      %584 = vst.msk [vmem:[%s228 + $0x58] sm:$0xff] %vm572, %v567
      %585 = vst.msk [vmem:[%s228 + $0x60] sm:$0xff] %vm572, %v568
      %586 = vst.msk [vmem:[%s228 + $0x68] sm:$0xff] %vm572, %v569
      %587 = vst.msk [vmem:[%s228 + $0x70] sm:$0xff] %vm572, %v570
      %588 = vst.msk [vmem:[%s228 + $0x78] sm:$0xff] %vm572, %v571
      %s589 = smul.u32 16, %s18
      %p590 = scmp.lt.s32.totalorder %s589, 31
      %s591 = scalar_select %p590, %s589, 31
      %s592 = smul.addr %s591, 8
      %s593 = scalar_lea.vmem %s5, %s592
      // Predicated region
      $region41: #{tpu_custom_call.1} parent=39 // pred_check
        %p594 = pneg %p146
      $region42: #{tpu_custom_call.1} parent=39 // pred_check_branch
        %596 = sbr.rel (%p594) target = $region44
      $region43: #{tpu_custom_call.1} parent=39 // pred_region
        %s597 = smul.u32 16, %s18
      $region44: #{tpu_custom_call.1} parent=39 // pred_fallthru
        _
    $region40: #{tpu_custom_call.1} parent=5 // pred_fallthru
      _
    %p598 = scmp.le.s32.totalorder 2, %s13
    // Predicated region
    $region45: #{tpu_custom_call.1} parent=5 // pred_check
      %p599 = pneg %p598
    $region46: #{tpu_custom_call.1} parent=5 // pred_check_branch
      %601 = sbr.rel (%p599) target = $region48
    $region47: #{tpu_custom_call.1} parent=5 // pred_region
      %s602 = ssub.s32 %s13, 2
      // Predicated region
      $region49: #{tpu_custom_call.1} parent=47 // pred_check
        %p603 = pneg %p152
      $region50: #{tpu_custom_call.1} parent=47 // pred_check_branch
        %605 = sbr.rel (%p603) target = $region52
      $region51: #{tpu_custom_call.1} parent=47 // pred_region
        %s606 = smul.u32 16, %s19
        %p607 = scmp.lt.s32.totalorder %s606, 31
        %s608 = scalar_select %p607, %s606, 31
        %s609 = smul.addr %s608, 8
        %s610 = scalar_lea.vmem %s5, %s609
      $region52: #{tpu_custom_call.1} parent=47 // pred_fallthru
        _
    $region48: #{tpu_custom_call.1} parent=5 // pred_fallthru
      _
  $region6: #{tpu_custom_call.1} parent=0 // loop_footer
    %s17 = sadd.s32 1, %s13
  $region7: #{tpu_custom_call.1} parent=0 // loop_footer_branch
    %12 = sbr.rel target = $region3
  $region8: #{tpu_custom_call.1} parent=0 // loop_exit
    _

</llo_original>
